<compile_context>
chip_gen: v5e
topology: v5e:2x2
jax: 0.10.0
libtpu: 0.0.40
codegen_flags: <defaults>
</compile_context>

<pallas_src>
import jax
import jax.numpy as jnp
from jax.experimental import pallas as pl
from jax.experimental.pallas import tpu as pltpu


# ----------------------------- Pallas kernel ------------------------------ #

def _feature_emb_attention_kernel(x_ref, q_ref, z_ref, a_ref):
    """One batch tile.

    x_ref : (tb, S*D)  lane-dense input slab (feature groups of D contiguous lanes)
    q_ref : (1, D)     query vector with BOTH 1/D**0.25 factors pre-folded
    z_ref : (tb, D)    weighted feature sum (uses the un-scaled x)
    a_ref : (tb, S)    normalised attention weights (float32)
    """
    D = z_ref.shape[-1]
    S = a_ref.shape[-1]

    q = q_ref[...].astype(jnp.float32)                        # (1, D)

    # Attention logits: <x[b, s, :], q/sqrt(D)> for every D-lane feature group.
    # (For bf16 inputs only these slices are upcast; for the spec'd f32 inputs
    # the casts are no-ops.)
    cols = []
    for s in range(S):                                        # S is tiny (8): unrolled
        xs = x_ref[:, s * D:(s + 1) * D].astype(jnp.float32)  # (tb, D) lane slice
        cols.append(jnp.sum(xs * q, axis=-1, keepdims=True))  # (tb, 1)
    logits = jnp.concatenate(cols, axis=-1)                   # (tb, S), S on lanes

    # Numerically stable softmax over the S axis (PyTorch Softmax(dim=1)).
    # Exact division (pl.reciprocal(approx=True) would risk the 1e-5 tolerance
    # and the divide is nowhere near the critical path of a DMA-bound kernel).
    m = jnp.max(logits, axis=-1, keepdims=True)
    e = jnp.exp(logits - m)
    attn = e / jnp.sum(e, axis=-1, keepdims=True)             # (tb, S)

    # z = attn @ X with the UN-scaled x (matches .bmm(X) in the module).
    # attn stays with S on lanes; each step lane-broadcasts one weight column.
    z = jnp.zeros(z_ref.shape, jnp.float32)
    for s in range(S):
        xs = x_ref[:, s * D:(s + 1) * D].astype(jnp.float32)
        z = z + attn[:, s:s + 1] * xs

    z_ref[...] = z.astype(z_ref.dtype)
    a_ref[...] = attn.astype(a_ref.dtype)


# ----------------------------- tile selection ------------------------------ #

# Target ~1 MiB of x per grid step: measured tile sweeps put 0.5-4 MiB tiles at
# ~85% of the HBM roofline (vs ~30% for tiny tiles), and every grid step costs
# ~0.35 us of fixed overhead.
_TARGET_TILE_BYTES = 1 << 20
# Hard cap so the double-buffered working set stays well below the smallest
# default scoped-VMEM limit (16 MiB on v5e) on every TPU generation.
_MAX_TB = 4096


def _pick_batch_tile(batch, row_bytes):
    """Rows of x per grid step: a multiple of 8 (sublane-aligned output blocks),
    ~_TARGET_TILE_BYTES of x per step, and >= 2 grid steps whenever the batch
    allows so both v7x TensorCores get a full-sized tile."""
    cap = max(8, min(_MAX_TB, _TARGET_TILE_BYTES // max(row_bytes, 1)))
    cap = (cap // 8) * 8
    if batch <= 8:
        return 8
    half = -(-batch // 2)            # ceil(batch / 2): keep >= 2 grid steps
    half = -(-half // 8) * 8         # round up to a multiple of 8
    return max(8, min(cap, half))


# --------------------------------- wrapper --------------------------------- #

def feature_emb_attention(x, queryv, *, tb=None):
    """Pallas-TPU forward of FeatureEmbAttention.

    x      : (B, S, D)  input features
    queryv : (D,)       learned query vector
    returns (z, attn_weights_norm) with shapes (B, D), (B, S) in float32.
    """
    B, S, D = x.shape
    itemsize = jnp.dtype(x.dtype).itemsize
    if tb is None:
        tb = _pick_batch_tile(B, S * D * itemsize)
    assert tb >= 8 and tb % 8 == 0, "batch tile must be a positive multiple of 8"

    # Fold BOTH 1/D**0.25 factors into the query once:
    #   (X / D**0.25) @ (q / D**0.25)  ==  X @ (q / sqrt(D))
    q_scaled = (queryv.astype(jnp.float32) / jnp.sqrt(jnp.float32(D))).reshape(1, D)

    # Lane-dense view of x: (B, S*D).  Free (row-major contiguous) reshape in
    # HBM; the DMA fills unpadded (tb, S*D) VMEM tiles.
    x2 = x.reshape(B, S * D)

    # Pad the batch up to a whole number of tiles (zero rows -> uniform softmax,
    # sliced off below).  Keeps the tuned tile size for any B.
    grid_b = pl.cdiv(B, tb)
    b_pad = grid_b * tb
    if b_pad != B:
        x2 = jnp.pad(x2, ((0, b_pad - B), (0, 0)))

    grid_spec = pltpu.PrefetchScalarGridSpec(
        num_scalar_prefetch=0,
        grid=(grid_b,),
        in_specs=[
            pl.BlockSpec((tb, S * D), lambda b: (b, 0)),   # x: one lane-dense slab/step
            pl.BlockSpec((1, D), lambda b: (0, 0)),        # queryv: resident in VMEM
        ],
        # Each output block spans the full (narrow) last dim -> contiguous HBM
        # writeback per step with minimal bytes (see header note 8).
        out_specs=[
            pl.BlockSpec((tb, D), lambda b: (b, 0)),       # z
            pl.BlockSpec((tb, S), lambda b: (b, 0)),       # attn_weights_norm
        ],
    )

    z, attn = pl.pallas_call(
        _feature_emb_attention_kernel,
        out_shape=(
            jax.ShapeDtypeStruct((b_pad, D), jnp.float32),
            jax.ShapeDtypeStruct((b_pad, S), jnp.float32),
        ),
        grid_spec=grid_spec,
        compiler_params=pltpu.CompilerParams(dimension_semantics=("parallel",)),
    )(x2, q_scaled)

    if b_pad != B:
        z, attn = z[:B], attn[:B]
    return z, attn


# --------------------------- pure-JAX reference ---------------------------- #

def feature_emb_attention_ref(x, queryv):
    D = x.shape[-1]
    s = 1.0 / (float(D) ** 0.25)
    attn = jnp.einsum("bsd,d->bs", x * s, queryv * s)
    attn_norm = jax.nn.softmax(attn, axis=1)
    z = jnp.einsum("bs,bsd->bd", attn_norm, x)      # un-scaled x, like .bmm(X)
    return z, attn_norm


# ----------------------------------- main ---------------------------------- #

if __name__ == "__main__":
    # Shapes consistent with the module: B DDI pairs, S=8 similarity types,
    # feat_dim D=32.
    B, S, D = 16, 8, 32
    key = jax.random.PRNGKey(0)
    kx, kq, kx2 = jax.random.split(key, 3)
    x = jax.random.normal(kx, (B, S, D), jnp.float32)
    queryv = jax.random.normal(kq, (D,), jnp.float32)

    z, attn = feature_emb_attention(x, queryv)              # tb=8 -> grid=(2,)
    z, attn = jax.block_until_ready((z, attn))

    z_ref, attn_ref = feature_emb_attention_ref(x, queryv)
    assert z.shape == (B, D) and attn.shape == (B, S)
    assert jnp.allclose(attn, attn_ref, atol=1e-5, rtol=1e-5), "attn mismatch vs reference"
    assert jnp.allclose(z, z_ref, atol=1e-5, rtol=1e-5), "z mismatch vs reference"

    # Awkward batch size: exercises the pad-to-tile path (no whole-batch
    # fallback block).
    B2 = 13
    x_odd = jax.random.normal(kx2, (B2, S, D), jnp.float32)
    z2, attn2 = jax.block_until_ready(feature_emb_attention(x_odd, queryv))
    z2_ref, attn2_ref = feature_emb_attention_ref(x_odd, queryv)
    assert z2.shape == (B2, D) and attn2.shape == (B2, S)
    assert jnp.allclose(attn2, attn2_ref, atol=1e-5, rtol=1e-5), "attn mismatch (padded batch)"
    assert jnp.allclose(z2, z2_ref, atol=1e-5, rtol=1e-5), "z mismatch (padded batch)"

    print("KERNEL_OK")
</pallas_src>

<mosaic_0001>
module attributes {stable_mosaic.version = 11 : i64} {
  func.func @_feature_emb_attention_kernel(%arg0: i32, %arg1: memref<8x256xf32, #tpu.memory_space<vmem>>, %arg2: memref<1x32xf32, #tpu.memory_space<vmem>>, %arg3: memref<8x32xf32, #tpu.memory_space<vmem>>, %arg4: memref<8x8xf32, #tpu.memory_space<vmem>>) attributes {dimension_semantics = [#tpu.dimension_semantics<parallel>], iteration_bounds = array<i64: 2>, scalar_prefetch = 0 : i64, scratch_operands = 0 : i64, tpu.core_type = #tpu.core_type<tc>, window_params = [{transform_indices = @transform_0, window_bounds = array<i64: 8, 256>}, {pipeline_mode = #tpu.pipeline_mode<synchronous>, transform_indices = @transform_1, window_bounds = array<i64: 1, 32>}, {transform_indices = @transform_2, window_bounds = array<i64: 8, 32>}, {transform_indices = @transform_3, window_bounds = array<i64: 8, 8>}]} {
    %c0 = arith.constant 0 : index
    %c0_0 = arith.constant 0 : index
    %0 = vector.load %arg2[%c0, %c0_0] : memref<1x32xf32, #tpu.memory_space<vmem>>, vector<1x32xf32>
    %c0_1 = arith.constant 0 : index
    %c0_2 = arith.constant 0 : index
    %1 = vector.load %arg1[%c0_1, %c0_2] : memref<8x256xf32, #tpu.memory_space<vmem>>, vector<8x32xf32>
    %2 = vector.broadcast %0 : vector<1x32xf32> to vector<8x32xf32>
    %3 = arith.mulf %1, %2 : vector<8x32xf32>
    %cst = arith.constant dense<0.000000e+00> : vector<8xf32>
    %4 = vector.multi_reduction <add>, %3, %cst [1] : vector<8x32xf32> to vector<8xf32>
    %5 = vector.shape_cast %4 : vector<8xf32> to vector<8x1xf32>
    %c0_3 = arith.constant 0 : index
    %c32 = arith.constant 32 : index
    %6 = vector.load %arg1[%c0_3, %c32] : memref<8x256xf32, #tpu.memory_space<vmem>>, vector<8x32xf32>
    %7 = vector.broadcast %0 : vector<1x32xf32> to vector<8x32xf32>
    %8 = arith.mulf %6, %7 : vector<8x32xf32>
    %cst_4 = arith.constant dense<0.000000e+00> : vector<8xf32>
    %9 = vector.multi_reduction <add>, %8, %cst_4 [1] : vector<8x32xf32> to vector<8xf32>
    %10 = vector.shape_cast %9 : vector<8xf32> to vector<8x1xf32>
    %c0_5 = arith.constant 0 : index
    %c64 = arith.constant 64 : index
    %11 = vector.load %arg1[%c0_5, %c64] : memref<8x256xf32, #tpu.memory_space<vmem>>, vector<8x32xf32>
    %12 = vector.broadcast %0 : vector<1x32xf32> to vector<8x32xf32>
    %13 = arith.mulf %11, %12 : vector<8x32xf32>
    %cst_6 = arith.constant dense<0.000000e+00> : vector<8xf32>
    %14 = vector.multi_reduction <add>, %13, %cst_6 [1] : vector<8x32xf32> to vector<8xf32>
    %15 = vector.shape_cast %14 : vector<8xf32> to vector<8x1xf32>
    %c0_7 = arith.constant 0 : index
    %c96 = arith.constant 96 : index
    %16 = vector.load %arg1[%c0_7, %c96] : memref<8x256xf32, #tpu.memory_space<vmem>>, vector<8x32xf32>
    %17 = vector.broadcast %0 : vector<1x32xf32> to vector<8x32xf32>
    %18 = arith.mulf %16, %17 : vector<8x32xf32>
    %cst_8 = arith.constant dense<0.000000e+00> : vector<8xf32>
    %19 = vector.multi_reduction <add>, %18, %cst_8 [1] : vector<8x32xf32> to vector<8xf32>
    %20 = vector.shape_cast %19 : vector<8xf32> to vector<8x1xf32>
    %c0_9 = arith.constant 0 : index
    %c128 = arith.constant 128 : index
    %21 = vector.load %arg1[%c0_9, %c128] : memref<8x256xf32, #tpu.memory_space<vmem>>, vector<8x32xf32>
    %22 = vector.broadcast %0 : vector<1x32xf32> to vector<8x32xf32>
    %23 = arith.mulf %21, %22 : vector<8x32xf32>
    %cst_10 = arith.constant dense<0.000000e+00> : vector<8xf32>
    %24 = vector.multi_reduction <add>, %23, %cst_10 [1] : vector<8x32xf32> to vector<8xf32>
    %25 = vector.shape_cast %24 : vector<8xf32> to vector<8x1xf32>
    %c0_11 = arith.constant 0 : index
    %c160 = arith.constant 160 : index
    %26 = vector.load %arg1[%c0_11, %c160] : memref<8x256xf32, #tpu.memory_space<vmem>>, vector<8x32xf32>
    %27 = vector.broadcast %0 : vector<1x32xf32> to vector<8x32xf32>
    %28 = arith.mulf %26, %27 : vector<8x32xf32>
    %cst_12 = arith.constant dense<0.000000e+00> : vector<8xf32>
    %29 = vector.multi_reduction <add>, %28, %cst_12 [1] : vector<8x32xf32> to vector<8xf32>
    %30 = vector.shape_cast %29 : vector<8xf32> to vector<8x1xf32>
    %c0_13 = arith.constant 0 : index
    %c192 = arith.constant 192 : index
    %31 = vector.load %arg1[%c0_13, %c192] : memref<8x256xf32, #tpu.memory_space<vmem>>, vector<8x32xf32>
    %32 = vector.broadcast %0 : vector<1x32xf32> to vector<8x32xf32>
    %33 = arith.mulf %31, %32 : vector<8x32xf32>
    %cst_14 = arith.constant dense<0.000000e+00> : vector<8xf32>
    %34 = vector.multi_reduction <add>, %33, %cst_14 [1] : vector<8x32xf32> to vector<8xf32>
    %35 = vector.shape_cast %34 : vector<8xf32> to vector<8x1xf32>
    %c0_15 = arith.constant 0 : index
    %c224 = arith.constant 224 : index
    %36 = vector.load %arg1[%c0_15, %c224] : memref<8x256xf32, #tpu.memory_space<vmem>>, vector<8x32xf32>
    %37 = vector.broadcast %0 : vector<1x32xf32> to vector<8x32xf32>
    %38 = arith.mulf %36, %37 : vector<8x32xf32>
    %cst_16 = arith.constant dense<0.000000e+00> : vector<8xf32>
    %39 = vector.multi_reduction <add>, %38, %cst_16 [1] : vector<8x32xf32> to vector<8xf32>
    %40 = vector.shape_cast %39 : vector<8xf32> to vector<8x1xf32>
    %41 = tpu.concatenate %5, %10, %15, %20, %25, %30, %35, %40 in 1 : vector<8x1xf32>, vector<8x1xf32>, vector<8x1xf32>, vector<8x1xf32>, vector<8x1xf32>, vector<8x1xf32>, vector<8x1xf32>, vector<8x1xf32> -> vector<8x8xf32>
    %cst_17 = arith.constant dense<0xFF800000> : vector<8xf32>
    %42 = vector.multi_reduction <maximumf>, %41, %cst_17 [1] : vector<8x8xf32> to vector<8xf32>
    %43 = vector.shape_cast %42 : vector<8xf32> to vector<8x1xf32>
    %44 = vector.broadcast %43 : vector<8x1xf32> to vector<8x8xf32>
    %45 = arith.subf %41, %44 : vector<8x8xf32>
    %46 = math.exp %45 : vector<8x8xf32>
    %cst_18 = arith.constant dense<0.000000e+00> : vector<8xf32>
    %47 = vector.multi_reduction <add>, %46, %cst_18 [1] : vector<8x8xf32> to vector<8xf32>
    %48 = vector.shape_cast %47 : vector<8xf32> to vector<8x1xf32>
    %49 = vector.broadcast %48 : vector<8x1xf32> to vector<8x8xf32>
    %50 = arith.divf %46, %49 : vector<8x8xf32>
    %cst_19 = arith.constant 0.000000e+00 : f32
    %51 = vector.broadcast %cst_19 : f32 to vector<8x32xf32>
    %c0_20 = arith.constant 0 : index
    %c0_21 = arith.constant 0 : index
    %52 = vector.load %arg1[%c0_20, %c0_21] : memref<8x256xf32, #tpu.memory_space<vmem>>, vector<8x32xf32>
    %53 = vector.extract_strided_slice %50 {offsets = [0, 0], sizes = [8, 1], strides = [1, 1]} : vector<8x8xf32> to vector<8x1xf32>
    %54 = vector.broadcast %53 : vector<8x1xf32> to vector<8x32xf32>
    %55 = arith.mulf %54, %52 : vector<8x32xf32>
    %56 = arith.addf %51, %55 : vector<8x32xf32>
    %c0_22 = arith.constant 0 : index
    %c32_23 = arith.constant 32 : index
    %57 = vector.load %arg1[%c0_22, %c32_23] : memref<8x256xf32, #tpu.memory_space<vmem>>, vector<8x32xf32>
    %58 = vector.extract_strided_slice %50 {offsets = [0, 1], sizes = [8, 1], strides = [1, 1]} : vector<8x8xf32> to vector<8x1xf32>
    %59 = vector.broadcast %58 : vector<8x1xf32> to vector<8x32xf32>
    %60 = arith.mulf %59, %57 : vector<8x32xf32>
    %61 = arith.addf %56, %60 : vector<8x32xf32>
    %c0_24 = arith.constant 0 : index
    %c64_25 = arith.constant 64 : index
    %62 = vector.load %arg1[%c0_24, %c64_25] : memref<8x256xf32, #tpu.memory_space<vmem>>, vector<8x32xf32>
    %63 = vector.extract_strided_slice %50 {offsets = [0, 2], sizes = [8, 1], strides = [1, 1]} : vector<8x8xf32> to vector<8x1xf32>
    %64 = vector.broadcast %63 : vector<8x1xf32> to vector<8x32xf32>
    %65 = arith.mulf %64, %62 : vector<8x32xf32>
    %66 = arith.addf %61, %65 : vector<8x32xf32>
    %c0_26 = arith.constant 0 : index
    %c96_27 = arith.constant 96 : index
    %67 = vector.load %arg1[%c0_26, %c96_27] : memref<8x256xf32, #tpu.memory_space<vmem>>, vector<8x32xf32>
    %68 = vector.extract_strided_slice %50 {offsets = [0, 3], sizes = [8, 1], strides = [1, 1]} : vector<8x8xf32> to vector<8x1xf32>
    %69 = vector.broadcast %68 : vector<8x1xf32> to vector<8x32xf32>
    %70 = arith.mulf %69, %67 : vector<8x32xf32>
    %71 = arith.addf %66, %70 : vector<8x32xf32>
    %c0_28 = arith.constant 0 : index
    %c128_29 = arith.constant 128 : index
    %72 = vector.load %arg1[%c0_28, %c128_29] : memref<8x256xf32, #tpu.memory_space<vmem>>, vector<8x32xf32>
    %73 = vector.extract_strided_slice %50 {offsets = [0, 4], sizes = [8, 1], strides = [1, 1]} : vector<8x8xf32> to vector<8x1xf32>
    %74 = vector.broadcast %73 : vector<8x1xf32> to vector<8x32xf32>
    %75 = arith.mulf %74, %72 : vector<8x32xf32>
    %76 = arith.addf %71, %75 : vector<8x32xf32>
    %c0_30 = arith.constant 0 : index
    %c160_31 = arith.constant 160 : index
    %77 = vector.load %arg1[%c0_30, %c160_31] : memref<8x256xf32, #tpu.memory_space<vmem>>, vector<8x32xf32>
    %78 = vector.extract_strided_slice %50 {offsets = [0, 5], sizes = [8, 1], strides = [1, 1]} : vector<8x8xf32> to vector<8x1xf32>
    %79 = vector.broadcast %78 : vector<8x1xf32> to vector<8x32xf32>
    %80 = arith.mulf %79, %77 : vector<8x32xf32>
    %81 = arith.addf %76, %80 : vector<8x32xf32>
    %c0_32 = arith.constant 0 : index
    %c192_33 = arith.constant 192 : index
    %82 = vector.load %arg1[%c0_32, %c192_33] : memref<8x256xf32, #tpu.memory_space<vmem>>, vector<8x32xf32>
    %83 = vector.extract_strided_slice %50 {offsets = [0, 6], sizes = [8, 1], strides = [1, 1]} : vector<8x8xf32> to vector<8x1xf32>
    %84 = vector.broadcast %83 : vector<8x1xf32> to vector<8x32xf32>
    %85 = arith.mulf %84, %82 : vector<8x32xf32>
    %86 = arith.addf %81, %85 : vector<8x32xf32>
    %c0_34 = arith.constant 0 : index
    %c224_35 = arith.constant 224 : index
    %87 = vector.load %arg1[%c0_34, %c224_35] : memref<8x256xf32, #tpu.memory_space<vmem>>, vector<8x32xf32>
    %88 = vector.extract_strided_slice %50 {offsets = [0, 7], sizes = [8, 1], strides = [1, 1]} : vector<8x8xf32> to vector<8x1xf32>
    %89 = vector.broadcast %88 : vector<8x1xf32> to vector<8x32xf32>
    %90 = arith.mulf %89, %87 : vector<8x32xf32>
    %91 = arith.addf %86, %90 : vector<8x32xf32>
    %c0_36 = arith.constant 0 : index
    %c0_37 = arith.constant 0 : index
    %92 = vector.load %arg3[%c0_36, %c0_37] : memref<8x32xf32, #tpu.memory_space<vmem>>, vector<8x32xf32>
    tpu.vector_store %arg3[%c0_36, %c0_37], %91 {strides = array<i32>} : memref<8x32xf32, #tpu.memory_space<vmem>>, vector<8x32xf32>,
    %c0_38 = arith.constant 0 : index
    %c0_39 = arith.constant 0 : index
    %93 = vector.load %arg4[%c0_38, %c0_39] : memref<8x8xf32, #tpu.memory_space<vmem>>, vector<8x8xf32>
    tpu.vector_store %arg4[%c0_38, %c0_39], %50 {strides = array<i32>} : memref<8x8xf32, #tpu.memory_space<vmem>>, vector<8x8xf32>,
    return
  }
  func.func @transform_0(%arg0: i32) -> (i32, i32) {
    %c0_i32 = arith.constant 0 : i32
    %c0_i32_0 = arith.constant 0 : i32
    return %arg0, %c0_i32 : i32, i32
  }
  func.func @transform_1(%arg0: i32) -> (i32, i32) {
    %c0_i32 = arith.constant 0 : i32
    %c0_i32_0 = arith.constant 0 : i32
    %c0_i32_1 = arith.constant 0 : i32
    return %c0_i32, %c0_i32_0 : i32, i32
  }
  func.func @transform_2(%arg0: i32) -> (i32, i32) {
    %c0_i32 = arith.constant 0 : i32
    %c0_i32_0 = arith.constant 0 : i32
    return %arg0, %c0_i32 : i32, i32
  }
  func.func @transform_3(%arg0: i32) -> (i32, i32) {
    %c0_i32 = arith.constant 0 : i32
    %c0_i32_0 = arith.constant 0 : i32
    return %arg0, %c0_i32 : i32, i32
  }
}

</mosaic_0001>

<llo_original>
// kernel: tpu_custom_call.1
$region0: #{tpu_custom_call.1}
  #allocation0 [shape = 'u32[]', space=smem, size = 0x4, offset = 0x4, fixed_abs, tag = 'smem constant byte address 0x4 - core index']
  #allocation1 [shape = 'u32[72,128]{1,0:T(1,128)}', space=vmem, size = 0x9000, scoped, tag = 'internal scratch']
  %s0 = inlined_call_operand.hbm [shape: f32[16,256], index: 0, kind: input, shape index: {}]
  %s1 = inlined_call_operand.hbm [shape: f32[1,32], index: 1, kind: input, shape index: {}]
  %s2 = inlined_call_operand.hbm [shape: f32[16,32], index: 2, kind: output, shape index: {0}]
  %s3 = inlined_call_operand.vmem [shape: f32[16,8], index: 3, kind: output, shape index: {1}]
  %4 = xla_tuple %s2, %s3
  %s5 = sld [smem:[#allocation0]]
  $region57: #{tpu_custom_call.1} parent=0
    _
  %s7 = ssub.s32 1, %s5
  %s8 = scalar_select 0, %s7, %s5
  $region1: #{tpu_custom_call.1} parent=0
    #allocation2 [shape = 'u8[16384]{0}', space=vmem, size = 0x4000, scoped, tag = 'input window, operand 0']
    #allocation3 [shape = 's32[2]{0}', space=sflag, size = 0x8, scoped, tag = 'scoped memory for tpu_custom_call.1']
    #allocation4 [shape = 's32[2]{0}', space=sflag, size = 0x8, scoped, tag = 'scoped memory for tpu_custom_call.1']
    #allocation5 [shape = 'u8[512]{0}', space=vmem, size = 0x400, scoped, tag = 'input window, operand 1, single buffered']
    #allocation6 [shape = 's32[1]{0}', space=sflag, size = 0x4, scoped, tag = 'scoped memory for tpu_custom_call.1']
    #allocation7 [shape = 'u8[8192]{0}', space=vmem, size = 0x2000, scoped, tag = 'output window, operand 0']
    %9 = vsyncpa [#allocation3], 0
    %s10 = scalar_lea.sflag [#allocation3], 1
    %11 = vsyncpa %s10, 0
    %12 = vsyncpa [#allocation6], 0
    %13 = vsyncpa [#allocation4], 0
    %s14 = scalar_lea.sflag [#allocation4], 1
    %15 = vsyncpa %s14, 0
    loop: start=0, step=1, limit=4
    $region2: #{tpu_custom_call.1} parent=1 // loop_pre_header
      _
    $region3: #{tpu_custom_call.1} parent=1 // loop_header
      %s17 = sphi 0, %s21
      %p18 = scmp.ge.s32.totalorder %s17, 4
      %s27 = sphi 0, %s29
      %s30 = sphi 0, %s27
      %s31 = sphi 0, %s30
      %s47 = sphi 0, %s31
      %s51 = sphi 0, %s51
      %s53 = sphi 0, %s51
      %s54 = sphi 0, %s53
      %s68 = sphi 0, %s54
      %s74 = sphi 0, %s76
      %s77 = sphi 0, %s74
      %s78 = sphi 0, %s77
      %s94 = sphi 0, %s78
      %s100 = sphi 0, %s102
      %s103 = sphi 0, %s100
      %s104 = sphi 0, %s103
      %s120 = sphi 0, %s104
    $region4: #{tpu_custom_call.1} parent=1 // loop_header_branch
      %20 = sbr.rel (%p18) target = $region8
    $region5: #{tpu_custom_call.1} parent=1 // loop_body
      %s22 = ssub.s32 %s17, 1
      %s23 = ssub.s32 %s17, 2
      %s24 = sadd.s32 %s17, 1
      %s25 = ssub.s32 %s17, %s24
      %p26 = scmp.eq.s32.totalorder %s25, 0
      %s28 = sadd.s32 %s27, 1
      %s29 = scalar_select %p26, %s27, %s28
      %p32 = pneg %p26
      %p33 = scmp.eq.s32.totalorder %s17, 1
      %p34 = por %p32, %p33
      %p35 = scmp.ne.s32.totalorder %s27, %s30
      %p36 = scmp.eq.s32.totalorder %s17, 0
      %p37 = por %p35, %p36
      %p38 = scmp.ne.s32.totalorder %s27, %s30
      %p39 = scmp.eq.s32.totalorder %s22, 1
      %p40 = por %p38, %p39
      %p41 = scmp.ne.s32.totalorder %s30, %s31
      %p42 = scmp.eq.s32.totalorder %s22, 0
      %p43 = por %p41, %p42
      %p44 = scmp.ne.s32.totalorder %s30, %s31
      %p45 = scmp.eq.s32.totalorder %s23, 1
      %p46 = por %p44, %p45
      %p48 = scmp.ne.s32.totalorder %s31, %s47
      %p49 = scmp.eq.s32.totalorder %s23, 0
      %p50 = por %p48, %p49
      %s52 = sadd.s32 %s51, 1
      %p55 = scmp.eq.s32.totalorder %s17, 1
      %p56 = scmp.ne.s32.totalorder %s51, %s53
      %p57 = scmp.eq.s32.totalorder %s17, 0
      %p58 = por %p56, %p57
      %p59 = scmp.ne.s32.totalorder %s51, %s53
      %p60 = scmp.eq.s32.totalorder %s22, 1
      %p61 = por %p59, %p60
      %p62 = scmp.ne.s32.totalorder %s53, %s54
      %p63 = scmp.eq.s32.totalorder %s22, 0
      %p64 = por %p62, %p63
      %p65 = scmp.ne.s32.totalorder %s53, %s54
      %p66 = scmp.eq.s32.totalorder %s23, 1
      %p67 = por %p65, %p66
      %p69 = scmp.ne.s32.totalorder %s54, %s68
      %p70 = scmp.eq.s32.totalorder %s23, 0
      %p71 = por %p69, %p70
      %s72 = ssub.s32 %s17, %s24
      %p73 = scmp.eq.s32.totalorder %s72, 0
      %s75 = sadd.s32 %s74, 1
      %s76 = scalar_select %p73, %s74, %s75
      %p79 = pneg %p73
      %p80 = scmp.eq.s32.totalorder %s17, 1
      %p81 = por %p79, %p80
      %p82 = scmp.ne.s32.totalorder %s74, %s77
      %p83 = scmp.eq.s32.totalorder %s17, 0
      %p84 = por %p82, %p83
      %p85 = scmp.ne.s32.totalorder %s74, %s77
      %p86 = scmp.eq.s32.totalorder %s22, 1
      %p87 = por %p85, %p86
      %p88 = scmp.ne.s32.totalorder %s77, %s78
      %p89 = scmp.eq.s32.totalorder %s22, 0
      %p90 = por %p88, %p89
      %p91 = scmp.ne.s32.totalorder %s77, %s78
      %p92 = scmp.eq.s32.totalorder %s23, 1
      %p93 = por %p91, %p92
      %p95 = scmp.ne.s32.totalorder %s78, %s94
      %p96 = scmp.eq.s32.totalorder %s23, 0
      %p97 = por %p95, %p96
      %s98 = ssub.s32 %s17, %s24
      %p99 = scmp.eq.s32.totalorder %s98, 0
      %s101 = sadd.s32 %s100, 1
      %s102 = scalar_select %p99, %s100, %s101
      %p105 = pneg %p99
      %p106 = scmp.eq.s32.totalorder %s17, 1
      %p107 = por %p105, %p106
      %p108 = scmp.ne.s32.totalorder %s100, %s103
      %p109 = scmp.eq.s32.totalorder %s17, 0
      %p110 = por %p108, %p109
      %p111 = scmp.ne.s32.totalorder %s100, %s103
      %p112 = scmp.eq.s32.totalorder %s22, 1
      %p113 = por %p111, %p112
      %p114 = scmp.ne.s32.totalorder %s103, %s104
      %p115 = scmp.eq.s32.totalorder %s22, 0
      %p116 = por %p114, %p115
      %p117 = scmp.ne.s32.totalorder %s103, %s104
      %p118 = scmp.eq.s32.totalorder %s23, 1
      %p119 = por %p117, %p118
      %p121 = scmp.ne.s32.totalorder %s104, %s120
      %p122 = scmp.eq.s32.totalorder %s23, 0
      %p123 = por %p121, %p122
      %p124 = scmp.le.s32.totalorder 1, %s17
      %p125 = scmp.lt.s32.totalorder %s17, 3
      %p126 = pnand %p124, %p125
      %p127 = pneg %p126
      // Predicated region
      $region9: #{tpu_custom_call.1} parent=5 // pred_check
        _
      $region10: #{tpu_custom_call.1} parent=5 // pred_check_branch
        %129 = sbr.rel (%p126) target = $region12
      $region11: #{tpu_custom_call.1} parent=5 // pred_region
        %s130 = ssub.s32 %s17, 1
        // Predicated region
        $region13: #{tpu_custom_call.1} parent=11 // pred_check
          %p131 = pneg %p64
        $region14: #{tpu_custom_call.1} parent=11 // pred_check_branch
          %133 = sbr.rel (%p131) target = $region16
        $region15: #{tpu_custom_call.1} parent=11 // pred_region
          %135 = vsyncadd [#allocation6], 0
          %s137 = sshll.u32 %s1, 4
          %s138 = int_to_ptr.hbm [resolvable:$true] %s137
          %s139 = sshll.u32 [#allocation5], 4
          %s140 = int_to_ptr.vmem [resolvable:$true] %s139
          %142 = dma.hbm_to_vmem [thread:$0]  %s138, 16, %s140, [#allocation6]
        $region16: #{tpu_custom_call.1} parent=11 // pred_fallthru
          _
      $region12: #{tpu_custom_call.1} parent=5 // pred_fallthru
        _
      %p143 = scmp.lt.s32.totalorder %s17, 2
      // Predicated region
      $region17: #{tpu_custom_call.1} parent=5 // pred_check
        %p144 = pneg %p143
      $region18: #{tpu_custom_call.1} parent=5 // pred_check_branch
        %146 = sbr.rel (%p144) target = $region20
      $region19: #{tpu_custom_call.1} parent=5 // pred_region
        // Predicated region
        $region21: #{tpu_custom_call.1} parent=19 // pred_check
          %p147 = pneg %p37
        $region22: #{tpu_custom_call.1} parent=19 // pred_check_branch
          %149 = sbr.rel (%p147) target = $region24
        $region23: #{tpu_custom_call.1} parent=19 // pred_region
          %s150 = sand.u32 %s27, 1
          %s151 = scalar_lea.sflag [#allocation3], %s150
          %s152 = sand.u32 %s27, 1
          %s153 = smul.addr %s152, 16
          %s154 = scalar_lea.vmem [#allocation2], %s153
          %156 = vsyncadd %s151, 0
          %s157 = smul.addr %s17, 2
          %s158 = smul.addr %s157, 8
          %s159 = scalar_lea.hbm %s0, %s158
          %s161 = sshll.u32 %s159, 4
          %s162 = int_to_ptr.hbm [resolvable:$true] %s161
          %s163 = sshll.u32 %s154, 4
          %s164 = int_to_ptr.vmem [resolvable:$true] %s163
          %166 = dma.hbm_to_vmem [thread:$0]  %s162, 256, %s164, %s151
        $region24: #{tpu_custom_call.1} parent=19 // pred_fallthru
          _
      $region20: #{tpu_custom_call.1} parent=5 // pred_fallthru
        _
      %p167 = scmp.le.s32.totalorder 1, %s17
      %p168 = scmp.lt.s32.totalorder %s17, 3
      %p169 = pnand %p167, %p168
      %p170 = pneg %p169
      // Predicated region
      $region25: #{tpu_custom_call.1} parent=5 // pred_check
        _
      $region26: #{tpu_custom_call.1} parent=5 // pred_check_branch
        %172 = sbr.rel (%p169) target = $region28
      $region27: #{tpu_custom_call.1} parent=5 // pred_region
        %s173 = ssub.s32 %s17, 1
        %s174 = sand.u32 %s30, 1
        %s175 = scalar_lea.sflag [#allocation3], %s174
        %s176 = sand.u32 %s30, 1
        %s177 = smul.addr %s176, 16
        %s178 = scalar_lea.vmem [#allocation2], %s177
        // Predicated region
        $region29: #{tpu_custom_call.1} parent=27 // pred_check
          %p179 = pneg %p43
        $region30: #{tpu_custom_call.1} parent=27 // pred_check_branch
          %181 = sbr.rel (%p179) target = $region32
        $region31: #{tpu_custom_call.1} parent=27 // pred_region
          %183 = dma.done %s175, 256
        $region32: #{tpu_custom_call.1} parent=27 // pred_fallthru
          _
        // Predicated region
        $region33: #{tpu_custom_call.1} parent=27 // pred_check
          %p184 = pneg %p64
        $region34: #{tpu_custom_call.1} parent=27 // pred_check_branch
          %186 = sbr.rel (%p184) target = $region36
        $region35: #{tpu_custom_call.1} parent=27 // pred_region
          %188 = dma.done [#allocation6], 16
        $region36: #{tpu_custom_call.1} parent=27 // pred_fallthru
          _
        %s189 = sand.u32 %s30, 1
        %s190 = scalar_lea.sflag [#allocation3], %s189
        %s191 = sand.u32 %s30, 1
        %s192 = smul.addr %s191, 16
        %s193 = scalar_lea.vmem [#allocation2], %s192
        %p194 = pneg %p43
        %p195 = pneg %p40
        %p196 = pneg %p64
        %p197 = pneg %p61
        %p198 = pneg %p90
        %p199 = pneg %p87
        %s200 = sand.u32 %s77, 1
        %s201 = scalar_lea.sflag [#allocation4], %s200
        %s202 = sand.u32 %s77, 1
        %s203 = smul.addr %s202, 8
        %s204 = scalar_lea.vmem [#allocation7], %s203
        %p205 = pneg %p116
        %p206 = pneg %p113
        %p207 = scmp.lt.s32.totalorder %s22, 1
        %s208 = scalar_select %p207, %s22, 1
        %s209 = smul.addr %s208, 8
        %s210 = scalar_lea.vmem %s3, %s209
        %p211 = scmp.lt.s32.totalorder %s22, 1
        %s212 = scalar_select %p211, %s22, 1
        %s213 = smul.addr %s212, 8
        %s214 = scalar_lea.vmem %s3, %s213
        %v215 = vld [vmem:[#allocation5] sm:$0x1]
        %v216 = vld [vmem:[%s178] sm:$0xff]
        %v218 = vperm.slane %v215, 0
        %v220 = vmul.f32 %v216, %v218
        %vm221 = vcmask 261120
        %v222 = vsel %vm221, %v220, 0.0
        %223 = vadd.xlane.f32.xlu0 %v222
        %v224 = vpop.xlane.xlu0 %223
        %225 = vrot.lane.b32.xlu0 %v218, 32
        %v226 = vpop.permute.xlu0 %225
        %v228 = vmul.f32 %v216, %v226
        %230 = vrot.lane.b32.xlu0 %v228, 96
        %v231 = vpop.permute.xlu0 %230
        %v233 = vsel %vm221, %v231, 0.0
        %234 = vadd.xlane.f32.xlu0 %v233
        %v235 = vpop.xlane.xlu0 %234
        %236 = vrot.lane.b32.xlu0 %v218, 64
        %v237 = vpop.permute.xlu0 %236
        %v239 = vmul.f32 %v216, %v237
        %241 = vrot.lane.b32.xlu0 %v239, 64
        %v242 = vpop.permute.xlu0 %241
        %v244 = vsel %vm221, %v242, 0.0
        %245 = vadd.xlane.f32.xlu0 %v244
        %v246 = vpop.xlane.xlu0 %245
        %247 = vrot.lane.b32.xlu0 %v218, 96
        %v248 = vpop.permute.xlu0 %247
        %v250 = vmul.f32 %v216, %v248
        %252 = vrot.lane.b32.xlu0 %v250, 32
        %v253 = vpop.permute.xlu0 %252
        %v255 = vsel %vm221, %v253, 0.0
        %256 = vadd.xlane.f32.xlu0 %v255
        %v257 = vpop.xlane.xlu0 %256
        %v258 = vld [vmem:[%s178 + $0x8] sm:$0xff]
        %v259 = vmul.f32 %v258, %v218
        %v260 = vsel %vm221, %v259, 0.0
        %261 = vadd.xlane.f32.xlu0 %v260
        %v262 = vpop.xlane.xlu0 %261
        %v263 = vmul.f32 %v258, %v226
        %265 = vrot.lane.b32.xlu0 %v263, 96
        %v266 = vpop.permute.xlu0 %265
        %v268 = vsel %vm221, %v266, 0.0
        %269 = vadd.xlane.f32.xlu0 %v268
        %v270 = vpop.xlane.xlu0 %269
        %v271 = vmul.f32 %v258, %v237
        %273 = vrot.lane.b32.xlu0 %v271, 64
        %v274 = vpop.permute.xlu0 %273
        %v276 = vsel %vm221, %v274, 0.0
        %277 = vadd.xlane.f32.xlu0 %v276
        %v278 = vpop.xlane.xlu0 %277
        %v279 = vmul.f32 %v258, %v248
        %281 = vrot.lane.b32.xlu0 %v279, 32
        %v282 = vpop.permute.xlu0 %281
        %v284 = vsel %vm221, %v282, 0.0
        %285 = vadd.xlane.f32.xlu0 %v284
        %v286 = vpop.xlane.xlu0 %285
        %vm287 = vcmask 7168
        %v288 = vsel %vm287, %v224, %v235
        %vm289 = vcmask 15360
        %v290 = vsel %vm289, %v288, %v246
        %vm291 = vcmask 23552
        %v292 = vsel %vm291, %v290, %v257
        %vm293 = vcmask 31744
        %v294 = vsel %vm293, %v292, %v262
        %vm295 = vcmask 39936
        %v296 = vsel %vm295, %v294, %v270
        %vm297 = vcmask 48128
        %v298 = vsel %vm297, %v296, %v278
        %vm299 = vcmask 56320
        %v300 = vsel %vm299, %v298, %v286
        %vm301 = vcmask 64512
        %v302 = vsel %vm301, %v300, -inf
        %303 = vmax.xlane.f32.xlu0 %v302
        %v304 = vpop.xlane.xlu0 %303
        %v305 = vsub.f32 %v300, %v304
        %v306 = vmul.f32 %v305, 1.442695
        %v307 = vpow.pop %v306
        %v308 = vsel %vm301, %v307, 0.0
        %309 = vadd.xlane.f32.xlu0 %v308
        %v310 = vpop.xlane.xlu0 %309
        %v311 = vrcp.pop %v310
        %v312 = vmul.f32 %v310, %v311
        %v313 = vsub.f32 1.0, %v312
        %v314 = vmul.f32 %v311, %v313
        %v315 = vadd.f32 %v311, %v314
        %vm316 = vweird.f32 %v310
        %vm317 = vweird.f32 %v311
        %vm318 = vmor %vm316, %vm317
        %v319 = vsel %vm318, %v311, %v315
        %v320 = vand.u32 2147483647, %v310
        %vm321 = vcmp.eq.f32.partialorder %v320, 8.507059e+37
        %v322 = vand.u32 %v310, 2147483648
        %v323 = vor.u32 1.1754944e-38, %v322
        %v324 = vsel %vm321, %v323, %v319
        %v325 = vmul.f32 %v307, %v324
        %327 = vset.pattern.permute.xlu0 0
        %328 = vperm.xlu0 %327, %v325
        %v329 = vpop.permute.xlu0 %328
        %v331 = vmul.f32 %v329, %v216
        %v332 = vadd.f32 %v331, 0.0
        %333 = vset.pattern.permute.xlu0 1
        %334 = vperm.xlu0 %333, %v325
        %v335 = vpop.permute.xlu0 %334
        %v337 = vmul.f32 %v335, %v216
        %339 = vrot.lane.b32.xlu0 %v337, 96
        %v340 = vpop.permute.xlu0 %339
        %v342 = vadd.f32 %v332, %v340
        %343 = vset.pattern.permute.xlu0 2
        %344 = vperm.xlu0 %343, %v325
        %v345 = vpop.permute.xlu0 %344
        %v347 = vmul.f32 %v345, %v216
        %349 = vrot.lane.b32.xlu0 %v347, 64
        %v350 = vpop.permute.xlu0 %349
        %v352 = vadd.f32 %v342, %v350
        %353 = vset.pattern.permute.xlu0 3
        %354 = vperm.xlu0 %353, %v325
        %v355 = vpop.permute.xlu0 %354
        %v357 = vmul.f32 %v355, %v216
        %359 = vrot.lane.b32.xlu0 %v357, 32
        %v360 = vpop.permute.xlu0 %359
        %v362 = vadd.f32 %v352, %v360
        %363 = vset.pattern.permute.xlu0 4
        %364 = vperm.xlu0 %363, %v325
        %v365 = vpop.permute.xlu0 %364
        %v367 = vmul.f32 %v365, %v258
        %v368 = vadd.f32 %v362, %v367
        %369 = vset.pattern.permute.xlu0 5
        %370 = vperm.xlu0 %369, %v325
        %v371 = vpop.permute.xlu0 %370
        %v373 = vmul.f32 %v371, %v258
        %375 = vrot.lane.b32.xlu0 %v373, 96
        %v376 = vpop.permute.xlu0 %375
        %v378 = vadd.f32 %v368, %v376
        %379 = vset.pattern.permute.xlu0 6
        %380 = vperm.xlu0 %379, %v325
        %v381 = vpop.permute.xlu0 %380
        %v383 = vmul.f32 %v381, %v258
        %385 = vrot.lane.b32.xlu0 %v383, 64
        %v386 = vpop.permute.xlu0 %385
        %v388 = vadd.f32 %v378, %v386
        %389 = vset.pattern.permute.xlu0 7
        %390 = vperm.xlu0 %389, %v325
        %v391 = vpop.permute.xlu0 %390
        %v393 = vmul.f32 %v391, %v258
        %395 = vrot.lane.b32.xlu0 %v393, 32
        %v396 = vpop.permute.xlu0 %395
        %v398 = vadd.f32 %v388, %v396
        %399 = vst.msk [vmem:[%s204] sm:$0xff] %vm221, %v398
        %400 = vst.msk [vmem:[%s214] sm:$0xff] %vm301, %v325
        %s401 = sand.u32 %s77, 1
        %s402 = scalar_lea.sflag [#allocation4], %s401
        %s403 = sand.u32 %s77, 1
        %s404 = smul.addr %s403, 8
        %s405 = scalar_lea.vmem [#allocation7], %s404
        %p406 = scmp.lt.s32.totalorder %s22, 1
        %s407 = scalar_select %p406, %s22, 1
        %s408 = smul.addr %s407, 8
        %s409 = scalar_lea.vmem %s3, %s408
        // Predicated region
        $region37: #{tpu_custom_call.1} parent=27 // pred_check
          %p410 = pneg %p87
        $region38: #{tpu_custom_call.1} parent=27 // pred_check_branch
          %412 = sbr.rel (%p410) target = $region40
        $region39: #{tpu_custom_call.1} parent=27 // pred_region
          %414 = vsyncadd %s402, 0
          %s415 = smul.addr %s22, 8
          %s416 = scalar_lea.hbm %s2, %s415
          %s418 = sshll.u32 %s405, 4
          %s419 = int_to_ptr.vmem [resolvable:$true] %s418
          %s420 = sshll.u32 %s416, 4
          %s421 = int_to_ptr.hbm [resolvable:$true] %s420
          %423 = dma.vmem_to_hbm [thread:$0]  %s419, 128, %s421, %s402
        $region40: #{tpu_custom_call.1} parent=27 // pred_fallthru
          _
        // Predicated region
        $region41: #{tpu_custom_call.1} parent=27 // pred_check
          %p424 = pneg %p113
        $region42: #{tpu_custom_call.1} parent=27 // pred_check_branch
          %426 = sbr.rel (%p424) target = $region44
        $region43: #{tpu_custom_call.1} parent=27 // pred_region
          _
        $region44: #{tpu_custom_call.1} parent=27 // pred_fallthru
          _
      $region28: #{tpu_custom_call.1} parent=5 // pred_fallthru
        _
      %p427 = scmp.le.s32.totalorder 2, %s17
      // Predicated region
      $region45: #{tpu_custom_call.1} parent=5 // pred_check
        %p428 = pneg %p427
      $region46: #{tpu_custom_call.1} parent=5 // pred_check_branch
        %430 = sbr.rel (%p428) target = $region48
      $region47: #{tpu_custom_call.1} parent=5 // pred_region
        %s431 = ssub.s32 %s17, 2
        // Predicated region
        $region49: #{tpu_custom_call.1} parent=47 // pred_check
          %p432 = pneg %p93
        $region50: #{tpu_custom_call.1} parent=47 // pred_check_branch
          %434 = sbr.rel (%p432) target = $region52
        $region51: #{tpu_custom_call.1} parent=47 // pred_region
          %s435 = sand.u32 %s78, 1
          %s436 = scalar_lea.sflag [#allocation4], %s435
          %s437 = sand.u32 %s78, 1
          %s438 = smul.addr %s437, 8
          %s439 = scalar_lea.vmem [#allocation7], %s438
          %441 = dma.done %s436, 128
        $region52: #{tpu_custom_call.1} parent=47 // pred_fallthru
          _
        // Predicated region
        $region53: #{tpu_custom_call.1} parent=47 // pred_check
          %p442 = pneg %p119
        $region54: #{tpu_custom_call.1} parent=47 // pred_check_branch
          %444 = sbr.rel (%p442) target = $region56
        $region55: #{tpu_custom_call.1} parent=47 // pred_region
          %p445 = scmp.lt.s32.totalorder %s23, 1
          %s446 = scalar_select %p445, %s23, 1
          %s447 = smul.addr %s446, 8
          %s448 = scalar_lea.vmem %s3, %s447
        $region56: #{tpu_custom_call.1} parent=47 // pred_fallthru
          _
      $region48: #{tpu_custom_call.1} parent=5 // pred_fallthru
        _
    $region6: #{tpu_custom_call.1} parent=1 // loop_footer
      %s21 = sadd.s32 1, %s17
    $region7: #{tpu_custom_call.1} parent=1 // loop_footer_branch
      %16 = sbr.rel target = $region3
    $region8: #{tpu_custom_call.1} parent=1 // loop_exit
      _
    %449 = vsyncpa [#allocation3], 1
    %s450 = scalar_lea.sflag [#allocation3], 1
    %451 = vsyncpa %s450, 1
    %452 = vsyncpa [#allocation6], 1
    %453 = vsyncpa [#allocation4], 1
    %s454 = scalar_lea.sflag [#allocation4], 1
    %455 = vsyncpa %s454, 1

</llo_original>
